<compile_context>
chip_gen: v7x
topology: tpu7x:2x2x1
jax: 0.10.0
libtpu: 0.0.40
codegen_flags: <defaults>
</compile_context>

<pallas_src>
import functools

import jax
import jax.numpy as jnp
from jax import lax
from jax.experimental import pallas as pl
from jax.experimental.pallas import tpu as pltpu


# ---------------------------------------------------------------------------
# Fused single-pass kernel: whole (TB, C, HW) slab per grid step.
# ---------------------------------------------------------------------------
def _se_fused_kernel(x_ref, w1t_ref, w2t_ref, o_ref, *, inv_hw):
    hw = x_ref.shape[-1]
    n_full = hw // 128
    rem = hw - n_full * 128

    # Squeeze (AdaptiveAvgPool2d(1)): chunk-wise f32 accumulation, streamed
    # straight off the pipeline buffer (never bind the whole slab to a
    # long-lived value).  Two accumulators shorten the serial add chain; the
    # bulk stays on the VPU, one cross-lane (XLU) reduce finishes it.
    if n_full >= 1:
        acc0 = x_ref[:, :, 0:128].astype(jnp.float32)
        acc1 = x_ref[:, :, 128:256].astype(jnp.float32) if n_full >= 2 else None
        for k in range(2, n_full):
            chunk = x_ref[:, :, k * 128:(k + 1) * 128].astype(jnp.float32)
            if k % 2 == 0:
                acc0 = acc0 + chunk
            else:
                acc1 = acc1 + chunk
        acc = acc0 if acc1 is None else acc0 + acc1
        pooled = jnp.sum(acc, axis=-1)
        if rem:
            pooled = pooled + jnp.sum(
                x_ref[:, :, n_full * 128:hw].astype(jnp.float32), axis=-1)
    else:  # HW < 128
        pooled = jnp.sum(x_ref[...].astype(jnp.float32), axis=-1)
    pooled = pooled * inv_hw                                    # true-HW mean

    # Excitation MLP on the MXU (M = TB rows per step).
    h = jnp.maximum(
        jnp.dot(pooled, w1t_ref[...], preferred_element_type=jnp.float32), 0.0)
    s = jax.nn.sigmoid(
        jnp.dot(h, w2t_ref[...], preferred_element_type=jnp.float32))

    # Scale: re-stream x from the pipeline buffer, native-dtype multiply.
    o_ref[...] = x_ref[...] * s.astype(o_ref.dtype)[:, :, None]


# ---------------------------------------------------------------------------
# Fallback pass 1: pooled-sum accumulation over HW tiles + MLP gate.
# ---------------------------------------------------------------------------
def _se_pool_mlp_kernel(x_ref, w1t_ref, w2t_ref, s_ref, acc_ref, *,
                        inv_hw, hw, thw):
    hw_i = pl.program_id(1)

    @pl.when(hw_i == 0)
    def _():
        acc_ref[...] = jnp.zeros_like(acc_ref)

    xv = x_ref[...].astype(jnp.float32)                        # (TB, C, THW)
    # Mask the out-of-bounds tail of the last HW tile (reads past the array
    # end are undefined); padding contributes 0, divisor stays the true HW.
    lane = lax.broadcasted_iota(jnp.int32, xv.shape, 2) + hw_i * thw
    xv = jnp.where(lane < hw, xv, 0.0)
    acc_ref[...] += jnp.sum(xv, axis=-1)

    @pl.when(hw_i == pl.num_programs(1) - 1)
    def _():
        pooled = acc_ref[...] * inv_hw
        h = jnp.maximum(
            jnp.dot(pooled, w1t_ref[...], preferred_element_type=jnp.float32),
            0.0)
        s = jax.nn.sigmoid(
            jnp.dot(h, w2t_ref[...], preferred_element_type=jnp.float32))
        s_ref[...] = s[:, :, None]


# ---------------------------------------------------------------------------
# Fallback pass 2: re-stream x and apply the per-channel gate.
# ---------------------------------------------------------------------------
def _se_scale_kernel(x_ref, s_ref, o_ref):
    o_ref[...] = x_ref[...] * s_ref[...].astype(o_ref.dtype)


# ---------------------------------------------------------------------------
# Sizing helpers.
# ---------------------------------------------------------------------------
def _vmem_limit_bytes():
    """Per-generation scoped-VMEM limit: <=48 MiB on v7x (64 MiB physical),
    ~96 MiB on v5e/v6e (128 MiB physical).  Conservative default if the
    hardware query is unavailable."""
    try:
        cap = int(pltpu.get_tpu_info().vmem_capacity_bytes)
    except Exception:
        cap = 64 << 20
    return int(min(cap * 3 // 4, 96 << 20))


def _choose_tb(B, per_elem_bytes, target_step_bytes, max_step_bytes,
               min_step_bytes=1 << 20):
    """Batch elements per grid step: aim for ~target bytes/step, never exceed
    the VMEM-derived hard cap, and prefer >= 4 grid steps (even count, so
    v7x's two TensorCores split the 'parallel' axis evenly) whenever each step
    would still move >= ~1 MiB.  Requires B % TB == 0."""
    cap = max(1, max_step_bytes // max(per_elem_bytes, 1))
    tb = max(1, min(B, target_step_bytes // max(per_elem_bytes, 1), cap))
    for steps in (8, 4, 2):
        if B >= steps and (B // steps) * per_elem_bytes >= min_step_bytes:
            tb = min(tb, B // steps)
            break
    tb = min(tb, cap)
    while B % tb:
        tb -= 1
    return tb


# Fused path statically unrolls at most this many 128-lane chunk adds; longer
# HW goes to the grid-tiled fallback (which also keeps VMEM small).
_MAX_FUSED_CHUNKS = 128


# ---------------------------------------------------------------------------
# Wrapper.
# ---------------------------------------------------------------------------
def se_layer_2d(x_nchw, w1, w2, *, force_fallback=False):
    """Forward of SELayer_2d.

    x_nchw: (B, C, H, W); w1: (C//r, C) = linear1.weight; w2: (C, C//r) =
    linear2.weight (both bias-free).  Returns (B, C, H, W).
    """
    B, C, H, W = x_nchw.shape
    HW = H * W
    x = x_nchw.reshape(B, C, HW)
    w1t = w1.T                      # (C, C//r): pooled @ W1^T (PyTorch Linear)
    w2t = w2.T                      # (C//r, C)

    itemsize = x.dtype.itemsize
    vmem_limit = _vmem_limit_bytes()
    target_step_bytes = vmem_limit // 8      # ~6 MiB v7x, ~12 MiB v5e/v6e
    max_step_bytes = vmem_limit // 5         # 4x double-buffered slabs < 80% of limit
    per_elem_bytes = C * HW * itemsize

    cost = pl.CostEstimate(
        flops=int(2 * B * C * HW + 4 * B * C * w1.shape[0]),
        transcendentals=int(B * C),
        bytes_accessed=int(2 * B * C * HW * itemsize
                           + (w1.size + w2.size) * w1.dtype.itemsize),
    )

    use_fused = (not force_fallback
                 and per_elem_bytes <= max_step_bytes
                 and pl.cdiv(HW, 128) <= _MAX_FUSED_CHUNKS)

    # TODO(synk): for tiny HW (e.g. 7x7) a channels-last (B, HW, C) layout would
    # keep the lane axis dense; needs the surrounding graph to supply it without
    # an extra transpose, so it is not done here.

    if use_fused:
        TB = _choose_tb(B, per_elem_bytes, target_step_bytes, max_step_bytes)
        kernel = functools.partial(_se_fused_kernel, inv_hw=1.0 / float(HW))
        out = pl.pallas_call(
            kernel,
            out_shape=jax.ShapeDtypeStruct((B, C, HW), x.dtype),
            grid_spec=pltpu.PrefetchScalarGridSpec(
                num_scalar_prefetch=0,
                grid=(B // TB,),
                in_specs=[
                    pl.BlockSpec((TB, C, HW), lambda b: (b, 0, 0)),  # x slab
                    pl.BlockSpec(w1t.shape, lambda b: (0, 0)),       # W1^T (resident)
                    pl.BlockSpec(w2t.shape, lambda b: (0, 0)),       # W2^T (resident)
                ],
                out_specs=pl.BlockSpec((TB, C, HW), lambda b: (b, 0, 0)),
            ),
            compiler_params=pltpu.CompilerParams(
                dimension_semantics=("parallel",),
                vmem_limit_bytes=vmem_limit,
            ),
            cost_estimate=cost,
        )(x, w1t, w2t)
        return out.reshape(B, C, H, W)

    # ---- Fallback: batch element too large for the fused path -> tile HW on
    # an 'arbitrary' grid axis; pass 1 pools + MLP gate, pass 2 scales.
    hw_pad = ((HW + 127) // 128) * 128
    thw = (target_step_bytes // max(C * itemsize, 1)) // 128 * 128
    thw = max(128, min(hw_pad, thw))
    n_hw = pl.cdiv(HW, thw)
    per_tile_bytes = C * thw * itemsize
    TBf = _choose_tb(B, per_tile_bytes, target_step_bytes, max_step_bytes)

    pool_kernel = functools.partial(
        _se_pool_mlp_kernel, inv_hw=1.0 / float(HW), hw=HW, thw=thw)
    gate = pl.pallas_call(
        pool_kernel,
        out_shape=jax.ShapeDtypeStruct((B, C, 1), jnp.float32),
        grid_spec=pltpu.PrefetchScalarGridSpec(
            num_scalar_prefetch=0,
            grid=(B // TBf, n_hw),
            in_specs=[
                pl.BlockSpec((TBf, C, thw), lambda b, h: (b, 0, h)),
                pl.BlockSpec(w1t.shape, lambda b, h: (0, 0)),
                pl.BlockSpec(w2t.shape, lambda b, h: (0, 0)),
            ],
            out_specs=pl.BlockSpec((TBf, C, 1), lambda b, h: (b, 0, 0)),
            scratch_shapes=[pltpu.VMEM((TBf, C), jnp.float32)],
        ),
        compiler_params=pltpu.CompilerParams(
            dimension_semantics=("parallel", "arbitrary"),
            vmem_limit_bytes=vmem_limit,
        ),
    )(x, w1t, w2t)

    out = pl.pallas_call(
        _se_scale_kernel,
        out_shape=jax.ShapeDtypeStruct((B, C, HW), x.dtype),
        grid_spec=pltpu.PrefetchScalarGridSpec(
            num_scalar_prefetch=0,
            grid=(B // TBf, n_hw),
            in_specs=[
                pl.BlockSpec((TBf, C, thw), lambda b, h: (b, 0, h)),
                pl.BlockSpec((TBf, C, 1), lambda b, h: (b, 0, 0)),
            ],
            out_specs=pl.BlockSpec((TBf, C, thw), lambda b, h: (b, 0, h)),
        ),
        compiler_params=pltpu.CompilerParams(
            dimension_semantics=("parallel", "parallel"),
            vmem_limit_bytes=vmem_limit,
        ),
        cost_estimate=cost,
    )(x, gate)
    return out.reshape(B, C, H, W)


def _reference(x_nchw, w1, w2):
    # Pure-JAX reference of the PyTorch forward.
    pooled = jnp.mean(x_nchw, axis=(2, 3))                    # (B, C)
    h = jnp.maximum(pooled @ w1.T, 0.0)                       # (B, C//r)
    s = jax.nn.sigmoid(h @ w2.T)                              # (B, C)
    return x_nchw * s[:, :, None, None]


if __name__ == "__main__":
    # Small shapes consistent with the module: reduction=16 requires C >= 16.
    B, C, H, W = 2, 32, 16, 16
    reduction = 16
    Cr = C // reduction  # 2

    key = jax.random.PRNGKey(0)
    kx, k1, k2, kx2 = jax.random.split(key, 4)
    x = jax.random.normal(kx, (B, C, H, W), dtype=jnp.float32)
    # Deterministic synthetic weights (nn.Linear(..., bias=False) shapes).
    w1 = jax.random.normal(k1, (Cr, C), dtype=jnp.float32) * 0.1  # linear1.weight
    w2 = jax.random.normal(k2, (C, Cr), dtype=jnp.float32) * 0.1  # linear2.weight

    # Fused path.
    out = jax.block_until_ready(se_layer_2d(x, w1, w2))
    ref = _reference(x, w1, w2)
    assert out.shape == (B, C, H, W)
    assert jnp.allclose(out, ref, atol=1e-4, rtol=1e-4)

    # Non-128-aligned spatial size (HW = 144): masked tail loads/stores instead
    # of host-side pad/slice.
    x2 = jax.random.normal(kx2, (B, C, 12, 12), dtype=jnp.float32)
    out2 = jax.block_until_ready(se_layer_2d(x2, w1, w2))
    assert jnp.allclose(out2, _reference(x2, w1, w2), atol=1e-4, rtol=1e-4)

    # HW-tiled fallback path (used when a batch element exceeds the VMEM budget).
    out3 = jax.block_until_ready(se_layer_2d(x, w1, w2, force_fallback=True))
    assert jnp.allclose(out3, ref, atol=1e-4, rtol=1e-4)

    print("KERNEL_OK")
</pallas_src>

<mosaic_0001>
module attributes {stable_mosaic.version = 11 : i64} {
  func.func @_se_fused_kernel(%arg0: i32, %arg1: memref<2x32x256xf32, #tpu.memory_space<vmem>>, %arg2: memref<32x2xf32, #tpu.memory_space<vmem>>, %arg3: memref<2x32xf32, #tpu.memory_space<vmem>>, %arg4: memref<2x32x256xf32, #tpu.memory_space<vmem>>) attributes {dimension_semantics = [#tpu.dimension_semantics<parallel>], iteration_bounds = array<i64: 1>, scalar_prefetch = 0 : i64, scratch_operands = 0 : i64, tpu.core_type = #tpu.core_type<tc>, window_params = [{transform_indices = @transform_0, window_bounds = array<i64: 2, 32, 256>}, {pipeline_mode = #tpu.pipeline_mode<synchronous>, transform_indices = @transform_1, window_bounds = array<i64: 32, 2>}, {pipeline_mode = #tpu.pipeline_mode<synchronous>, transform_indices = @transform_2, window_bounds = array<i64: 2, 32>}, {transform_indices = @transform_3, window_bounds = array<i64: 2, 32, 256>}]} {
    %c0 = arith.constant 0 : index
    %c0_0 = arith.constant 0 : index
    %c0_1 = arith.constant 0 : index
    %0 = vector.load %arg1[%c0, %c0_0, %c0_1] : memref<2x32x256xf32, #tpu.memory_space<vmem>>, vector<2x32x128xf32>
    %c0_2 = arith.constant 0 : index
    %c0_3 = arith.constant 0 : index
    %c128 = arith.constant 128 : index
    %1 = vector.load %arg1[%c0_2, %c0_3, %c128] : memref<2x32x256xf32, #tpu.memory_space<vmem>>, vector<2x32x128xf32>
    %2 = arith.addf %0, %1 : vector<2x32x128xf32>
    %cst = arith.constant dense<0.000000e+00> : vector<2x32xf32>
    %3 = vector.multi_reduction <add>, %2, %cst [2] : vector<2x32x128xf32> to vector<2x32xf32>
    %cst_4 = arith.constant 3.906250e-03 : f32
    %4 = vector.broadcast %cst_4 : f32 to vector<2x32xf32>
    %5 = arith.mulf %3, %4 : vector<2x32xf32>
    %c0_5 = arith.constant 0 : index
    %c0_6 = arith.constant 0 : index
    %6 = vector.load %arg2[%c0_5, %c0_6] : memref<32x2xf32, #tpu.memory_space<vmem>>, vector<32x2xf32>
    %cst_7 = arith.constant dense<0.000000e+00> : vector<2x2xf32>
    %7 = tpu.matmul %5, %6, %cst_7 {dimension_numbers = #tpu.dot_dimension_numbers<[1], [0], [0], [1], [0, 0, 1, 1], [], []>} : vector<2x32xf32>, vector<32x2xf32>, vector<2x2xf32> -> vector<2x2xf32>
    %cst_8 = arith.constant 0.000000e+00 : f32
    %8 = vector.broadcast %cst_8 : f32 to vector<2x2xf32>
    %9 = arith.maximumf %7, %8 : vector<2x2xf32>
    %c0_9 = arith.constant 0 : index
    %c0_10 = arith.constant 0 : index
    %10 = vector.load %arg3[%c0_9, %c0_10] : memref<2x32xf32, #tpu.memory_space<vmem>>, vector<2x32xf32>
    %cst_11 = arith.constant dense<0.000000e+00> : vector<2x32xf32>
    %11 = tpu.matmul %9, %10, %cst_11 {dimension_numbers = #tpu.dot_dimension_numbers<[1], [0], [0], [1], [0, 0, 1, 1], [], []>} : vector<2x2xf32>, vector<2x32xf32>, vector<2x32xf32> -> vector<2x32xf32>
    %12 = arith.negf %11 : vector<2x32xf32>
    %13 = math.exp %12 : vector<2x32xf32>
    %cst_12 = arith.constant 1.000000e+00 : f32
    %14 = vector.broadcast %cst_12 : f32 to vector<2x32xf32>
    %15 = arith.addf %14, %13 : vector<2x32xf32>
    %16 = arith.divf %14, %15 : vector<2x32xf32>
    %c0_13 = arith.constant 0 : index
    %c0_14 = arith.constant 0 : index
    %c0_15 = arith.constant 0 : index
    %17 = vector.load %arg1[%c0_13, %c0_14, %c0_15] : memref<2x32x256xf32, #tpu.memory_space<vmem>>, vector<2x32x256xf32>
    %18 = vector.shape_cast %16 : vector<2x32xf32> to vector<2x32x1xf32>
    %19 = vector.broadcast %18 : vector<2x32x1xf32> to vector<2x32x256xf32>
    %20 = arith.mulf %17, %19 : vector<2x32x256xf32>
    %c0_16 = arith.constant 0 : index
    %c0_17 = arith.constant 0 : index
    %c0_18 = arith.constant 0 : index
    %21 = vector.load %arg4[%c0_16, %c0_17, %c0_18] : memref<2x32x256xf32, #tpu.memory_space<vmem>>, vector<2x32x256xf32>
    tpu.vector_store %arg4[%c0_16, %c0_17, %c0_18], %20 {strides = array<i32>} : memref<2x32x256xf32, #tpu.memory_space<vmem>>, vector<2x32x256xf32>,
    return
  }
  func.func @transform_0(%arg0: i32) -> (i32, i32, i32) {
    %c0_i32 = arith.constant 0 : i32
    %c0_i32_0 = arith.constant 0 : i32
    %c0_i32_1 = arith.constant 0 : i32
    return %arg0, %c0_i32, %c0_i32_0 : i32, i32, i32
  }
  func.func @transform_1(%arg0: i32) -> (i32, i32) {
    %c0_i32 = arith.constant 0 : i32
    %c0_i32_0 = arith.constant 0 : i32
    %c0_i32_1 = arith.constant 0 : i32
    return %c0_i32, %c0_i32_0 : i32, i32
  }
  func.func @transform_2(%arg0: i32) -> (i32, i32) {
    %c0_i32 = arith.constant 0 : i32
    %c0_i32_0 = arith.constant 0 : i32
    %c0_i32_1 = arith.constant 0 : i32
    return %c0_i32, %c0_i32_0 : i32, i32
  }
  func.func @transform_3(%arg0: i32) -> (i32, i32, i32) {
    %c0_i32 = arith.constant 0 : i32
    %c0_i32_0 = arith.constant 0 : i32
    %c0_i32_1 = arith.constant 0 : i32
    return %arg0, %c0_i32, %c0_i32_0 : i32, i32, i32
  }
}

</mosaic_0001>

<llo_original>
// kernel: tpu_custom_call.1
$region0: #{tpu_custom_call.1}
  #allocation0 [shape = 'u32[]', space=smem, size = 0x4, offset = 0x4, fixed_abs, tag = 'smem constant byte address 0x4 - core index']
  #allocation1 [shape = 'u32[144,128]{1,0:T(1,128)}', space=vmem, size = 0x12000, scoped, tag = 'internal scratch']
  %s0 = inlined_call_operand.hbm [shape: f32[2,32,256], index: 0, kind: input, shape index: {}]
  %s1 = inlined_call_operand.vmem [shape: f32[32,2], index: 1, kind: input, shape index: {}]
  %s2 = inlined_call_operand.vmem [shape: f32[2,32], index: 2, kind: input, shape index: {}]
  %s3 = inlined_call_operand.hbm [shape: f32[2,32,256], index: 3, kind: output, shape index: {}]
  %s4 = sld [smem:[#allocation0]]
  $region26: #{tpu_custom_call.1} parent=0
    _
  %s6 = ssub.s32 1, %s4
  %s7 = scalar_select 0, %s6, %s4
  $region1: #{tpu_custom_call.1} parent=0
    #allocation2 [shape = 'u8[65536]{0}', space=vmem, size = 0x10000, scoped, tag = 'input window, operand 0, single buffered']
    #allocation3 [shape = 's32[1]{0}', space=sflag, size = 0x4, scoped, tag = 'scoped memory for tpu_custom_call.1']
    #allocation4 [shape = 's32[1]{0}', space=sflag, size = 0x4, scoped, tag = 'scoped memory for tpu_custom_call.1']
    #allocation5 [shape = 'u8[65536]{0}', space=vmem, size = 0x10000, scoped, tag = 'output window, operand 0, single buffered']
    %8 = vsyncpa [#allocation3], 0
    %9 = vsyncpa [#allocation4], 0
    // Predicated region
    $region2: #{tpu_custom_call.1} parent=1 // pred_check
      _
    $region3: #{tpu_custom_call.1} parent=1 // pred_check_branch
      %11 = sbr.rel (0) target = $region5
    $region4: #{tpu_custom_call.1} parent=1 // pred_region
      %s13 = ssub.s32 2048, 2048
      %14 = vsyncadd [#allocation3], %s13
      %s15 = sshll.u32 [#allocation2], 4
      %s16 = int_to_ptr.vmem [resolvable:$true] %s15
      %21 = dma.hbm_to_vmem [thread:$0]  %s0, 2048, %s16, [#allocation3], 256, 256, 16
    $region5: #{tpu_custom_call.1} parent=1 // pred_fallthru
      _
    // Predicated region
    $region6: #{tpu_custom_call.1} parent=1 // pred_check
      _
    $region7: #{tpu_custom_call.1} parent=1 // pred_check_branch
      %23 = sbr.rel (0) target = $region9
    $region8: #{tpu_custom_call.1} parent=1 // pred_region
      _
    $region9: #{tpu_custom_call.1} parent=1 // pred_fallthru
      _
    // Predicated region
    $region10: #{tpu_custom_call.1} parent=1 // pred_check
      _
    $region11: #{tpu_custom_call.1} parent=1 // pred_check_branch
      %25 = sbr.rel (0) target = $region13
    $region12: #{tpu_custom_call.1} parent=1 // pred_region
      _
    $region13: #{tpu_custom_call.1} parent=1 // pred_fallthru
      _
    // Predicated region
    $region14: #{tpu_custom_call.1} parent=1 // pred_check
      _
    $region15: #{tpu_custom_call.1} parent=1 // pred_check_branch
      %27 = sbr.rel (0) target = $region17
    $region16: #{tpu_custom_call.1} parent=1 // pred_region
      %28 = dma.done [#allocation3], 2048
    $region17: #{tpu_custom_call.1} parent=1 // pred_fallthru
      _
    %v29 = vld [vmem:[#allocation2] sm:$0xff]
    %v30 = vld [vmem:[#allocation2 + $0x10] sm:$0xff]
    %v31 = vld [vmem:[#allocation2 + $0x20] sm:$0xff]
    %v32 = vld [vmem:[#allocation2 + $0x30] sm:$0xff]
    %v33 = vld [vmem:[#allocation2 + $0x40] sm:$0xff]
    %v34 = vld [vmem:[#allocation2 + $0x50] sm:$0xff]
    %v35 = vld [vmem:[#allocation2 + $0x60] sm:$0xff]
    %v36 = vld [vmem:[#allocation2 + $0x70] sm:$0xff]
    %v37 = vld [vmem:[#allocation2 + $0x8] sm:$0xff]
    %v38 = vld [vmem:[#allocation2 + $0x18] sm:$0xff]
    %v39 = vld [vmem:[#allocation2 + $0x28] sm:$0xff]
    %v40 = vld [vmem:[#allocation2 + $0x38] sm:$0xff]
    %v41 = vld [vmem:[#allocation2 + $0x48] sm:$0xff]
    %v42 = vld [vmem:[#allocation2 + $0x58] sm:$0xff]
    %v43 = vld [vmem:[#allocation2 + $0x68] sm:$0xff]
    %v44 = vld [vmem:[#allocation2 + $0x78] sm:$0xff]
    %v45 = vadd.f32 %v29, %v37
    %v46 = vadd.f32 %v30, %v38
    %v47 = vadd.f32 %v31, %v39
    %v48 = vadd.f32 %v32, %v40
    %v49 = vadd.f32 %v33, %v41
    %v50 = vadd.f32 %v34, %v42
    %v51 = vadd.f32 %v35, %v43
    %v52 = vadd.f32 %v36, %v44
    %53 = vadd.xlane.f32.xlu0 %v45
    %v54 = vpop.xlane.xlu0 %53
    %55 = vadd.xlane.f32.xlu0 %v46
    %v56 = vpop.xlane.xlu0 %55
    %57 = vadd.xlane.f32.xlu0 %v47
    %v58 = vpop.xlane.xlu0 %57
    %59 = vadd.xlane.f32.xlu0 %v48
    %v60 = vpop.xlane.xlu0 %59
    %61 = vadd.xlane.f32.xlu0 %v49
    %v62 = vpop.xlane.xlu0 %61
    %63 = vadd.xlane.f32.xlu0 %v50
    %v64 = vpop.xlane.xlu0 %63
    %65 = vadd.xlane.f32.xlu0 %v51
    %v66 = vpop.xlane.xlu0 %65
    %67 = vadd.xlane.f32.xlu0 %v52
    %v68 = vpop.xlane.xlu0 %67
    %v69 = vmul.f32 %v54, 0.00390625
    %v70 = vmul.f32 %v56, 0.00390625
    %v71 = vmul.f32 %v58, 0.00390625
    %v72 = vmul.f32 %v60, 0.00390625
    %v73 = vmul.f32 %v62, 0.00390625
    %v74 = vmul.f32 %v64, 0.00390625
    %v75 = vmul.f32 %v66, 0.00390625
    %v76 = vmul.f32 %v68, 0.00390625
    %v77 = vld [vmem:[%s1] sm:$0xff]
    %v78 = vld [vmem:[%s1 + $0x8] sm:$0xff]
    %v79 = vld [vmem:[%s1 + $0x10] sm:$0xff]
    %v80 = vld [vmem:[%s1 + $0x18] sm:$0xff]
    %v89 = vlaneseq
    %v90 = vand.u32 %v89, 127
    %v91 = vlaneseq
    %v92 = vshrl.u32 %v91, 7
    %v93 = vsub.s32 %v90, %v92
    %v94 = vrot.slane %v69, %v93
    %v95 = vadd.s32 %v90, 4294967288
    %v96 = vlaneseq
    %v97 = vshrl.u32 %v96, 7
    %v98 = vsub.s32 %v95, %v97
    %v99 = vrot.slane %v70, %v98
    %vm100 = vcmask 130112
    %v101 = vsel %vm100, %v99, %v94
    %v102 = vadd.s32 %v90, 4294967280
    %v103 = vlaneseq
    %v104 = vshrl.u32 %v103, 7
    %v105 = vsub.s32 %v102, %v104
    %v106 = vrot.slane %v71, %v105
    %vm107 = vcmask 195712
    %v108 = vsel %vm107, %v106, %v101
    %v109 = vadd.s32 %v90, 4294967272
    %v110 = vlaneseq
    %v111 = vshrl.u32 %v110, 7
    %v112 = vsub.s32 %v109, %v111
    %v113 = vrot.slane %v72, %v112
    %vm114 = vcmask 261312
    %v115 = vsel %vm114, %v113, %v108
    %v116 = vlaneseq
    %v117 = vshrl.u32 %v116, 7
    %v118 = vsub.s32 %v90, %v117
    %v119 = vrot.slane %v73, %v118
    %v120 = vlaneseq
    %v121 = vshrl.u32 %v120, 7
    %v122 = vsub.s32 %v95, %v121
    %v123 = vrot.slane %v74, %v122
    %v124 = vsel %vm100, %v123, %v119
    %v125 = vlaneseq
    %v126 = vshrl.u32 %v125, 7
    %v127 = vsub.s32 %v102, %v126
    %v128 = vrot.slane %v75, %v127
    %v129 = vsel %vm107, %v128, %v124
    %v130 = vlaneseq
    %v131 = vshrl.u32 %v130, 7
    %v132 = vsub.s32 %v109, %v131
    %v133 = vrot.slane %v76, %v132
    %v134 = vsel %vm114, %v133, %v129
    %vm135 = vcmask 1041409
    %v136 = vsel %vm135, %v134, %v115
    %vm137 = vcmask 261120
    %v138 = vsel %vm137, %v136, 0
    %140 = vmatprep.subr.mxu0 0.0
    %141 = vmatpush1.msra.mxu0 %v77
    %142 = vmatprep.subr.mxu0 0.0
    %143 = vmatpush1.msra.mxu0 %v78
    %144 = vmatprep.subr.mxu0 0.0
    %145 = vmatpush1.msra.mxu0 %v79
    %146 = vmatprep.subr.mxu0 0.0
    %147 = vmatpush1.msra.mxu0 %v80
    %148 = vmatprep.subr.mxu0 0.0
    %149 = vmatpush1.msra.mxu0 0.0
    %150 = vmatprep.subr.mxu0 0.0
    %151 = vmatpush1.msra.mxu0 0.0
    %152 = vmatprep.subr.mxu0 0.0
    %153 = vmatpush1.msra.mxu0 0.0
    %154 = vmatprep.subr.mxu0 0.0
    %155 = vmatpush1.msra.mxu0 0.0
    %156 = vmatprep.subr.mxu0 0.0
    %157 = vmatpush1.msra.mxu0 0.0
    %158 = vmatprep.subr.mxu0 0.0
    %159 = vmatpush1.msra.mxu0 0.0
    %160 = vmatprep.subr.mxu0 0.0
    %161 = vmatpush1.msra.mxu0 0.0
    %162 = vmatprep.subr.mxu0 0.0
    %163 = vmatpush1.msra.mxu0 0.0
    %164 = vmatprep.subr.mxu0 0.0
    %165 = vmatpush1.msra.mxu0 0.0
    %166 = vmatprep.subr.mxu0 0.0
    %167 = vmatpush1.msra.mxu0 0.0
    %168 = vmatprep.subr.mxu0 0.0
    %169 = vmatpush1.msra.mxu0 0.0
    %170 = vmatprep.subr.mxu0 0.0
    %171 = vmatpush1.msra.mxu0 0.0
    %172 = vmatprep.subr.mxu0 0.0
    %173 = vmatpush1.msra.mxu0 0.0
    %174 = vmatprep.subr.mxu0 0.0
    %175 = vmatpush1.msra.mxu0 0.0
    %176 = vmatprep.subr.mxu0 0.0
    %177 = vmatpush1.msra.mxu0 0.0
    %178 = vmatprep.subr.mxu0 0.0
    %179 = vmatpush1.msra.mxu0 0.0
    %180 = vmatprep.subr.mxu0 0.0
    %181 = vmatpush1.msra.mxu0 0.0
    %182 = vmatprep.subr.mxu0 0.0
    %183 = vmatpush1.msra.mxu0 0.0
    %184 = vmatprep.subr.mxu0 0.0
    %185 = vmatpush1.msra.mxu0 0.0
    %186 = vmatprep.subr.mxu0 0.0
    %187 = vmatpush1.msra.mxu0 0.0
    %188 = vmatprep.subr.mxu0 0.0
    %189 = vmatpush1.msra.mxu0 0.0
    %190 = vmatprep.subr.mxu0 0.0
    %191 = vmatpush1.msra.mxu0 0.0
    %192 = vmatprep.subr.mxu0 0.0
    %193 = vmatpush1.msra.mxu0 0.0
    %194 = vmatprep.subr.mxu0 0.0
    %195 = vmatpush1.msra.mxu0 0.0
    %196 = vmatprep.subr.mxu0 0.0
    %197 = vmatpush1.msra.mxu0 0.0
    %198 = vmatprep.subr.mxu0 0.0
    %199 = vmatpush1.msra.mxu0 0.0
    %200 = vmatprep.subr.mxu0 0.0
    %201 = vmatpush1.msra.mxu0 0.0
    %202 = vmatprep.subr.mxu0 0.0
    %203 = vmatpush1.msra.mxu0 0.0
    %204 = vmatprep.mubr.f32.mxu0 0.0
    %205 = vmatmul.mubr.f32.gmra.mrb[0].mxu0 %v138
    %v206 = vpop.f32.mrb[0].mxu0
    %v207 = vadd.f32 0.0, %v206
    %v208 = vpop.f32.mrb[0].mxu0
    %209 = vdwg.mxu0
    %v210 = vmax.f32 %v207, 0.0
    %v211 = vld [vmem:[%s2] sm:$0x3]
    %vm212 = vcmask 15360
    %v214 = vsel %vm212, %v210, 0
    %vm216 = vcmask 1041408
    %v218 = vsel %vm216, %v211, 0
    %220 = vmatprep.subr.mxu0 0.0
    %221 = vmatpush1.msra.mxu0 %v218
    %222 = vmatprep.subr.mxu0 0.0
    %223 = vmatpush1.msra.mxu0 0.0
    %224 = vmatprep.subr.mxu0 0.0
    %225 = vmatpush1.msra.mxu0 0.0
    %226 = vmatprep.subr.mxu0 0.0
    %227 = vmatpush1.msra.mxu0 0.0
    %228 = vmatprep.subr.mxu0 0.0
    %229 = vmatpush1.msra.mxu0 0.0
    %230 = vmatprep.subr.mxu0 0.0
    %231 = vmatpush1.msra.mxu0 0.0
    %232 = vmatprep.subr.mxu0 0.0
    %233 = vmatpush1.msra.mxu0 0.0
    %234 = vmatprep.subr.mxu0 0.0
    %235 = vmatpush1.msra.mxu0 0.0
    %236 = vmatprep.subr.mxu0 0.0
    %237 = vmatpush1.msra.mxu0 0.0
    %238 = vmatprep.subr.mxu0 0.0
    %239 = vmatpush1.msra.mxu0 0.0
    %240 = vmatprep.subr.mxu0 0.0
    %241 = vmatpush1.msra.mxu0 0.0
    %242 = vmatprep.subr.mxu0 0.0
    %243 = vmatpush1.msra.mxu0 0.0
    %244 = vmatprep.subr.mxu0 0.0
    %245 = vmatpush1.msra.mxu0 0.0
    %246 = vmatprep.subr.mxu0 0.0
    %247 = vmatpush1.msra.mxu0 0.0
    %248 = vmatprep.subr.mxu0 0.0
    %249 = vmatpush1.msra.mxu0 0.0
    %250 = vmatprep.subr.mxu0 0.0
    %251 = vmatpush1.msra.mxu0 0.0
    %252 = vmatprep.subr.mxu0 0.0
    %253 = vmatpush1.msra.mxu0 0.0
    %254 = vmatprep.subr.mxu0 0.0
    %255 = vmatpush1.msra.mxu0 0.0
    %256 = vmatprep.subr.mxu0 0.0
    %257 = vmatpush1.msra.mxu0 0.0
    %258 = vmatprep.subr.mxu0 0.0
    %259 = vmatpush1.msra.mxu0 0.0
    %260 = vmatprep.subr.mxu0 0.0
    %261 = vmatpush1.msra.mxu0 0.0
    %262 = vmatprep.subr.mxu0 0.0
    %263 = vmatpush1.msra.mxu0 0.0
    %264 = vmatprep.subr.mxu0 0.0
    %265 = vmatpush1.msra.mxu0 0.0
    %266 = vmatprep.subr.mxu0 0.0
    %267 = vmatpush1.msra.mxu0 0.0
    %268 = vmatprep.subr.mxu0 0.0
    %269 = vmatpush1.msra.mxu0 0.0
    %270 = vmatprep.subr.mxu0 0.0
    %271 = vmatpush1.msra.mxu0 0.0
    %272 = vmatprep.subr.mxu0 0.0
    %273 = vmatpush1.msra.mxu0 0.0
    %274 = vmatprep.subr.mxu0 0.0
    %275 = vmatpush1.msra.mxu0 0.0
    %276 = vmatprep.subr.mxu0 0.0
    %277 = vmatpush1.msra.mxu0 0.0
    %278 = vmatprep.subr.mxu0 0.0
    %279 = vmatpush1.msra.mxu0 0.0
    %280 = vmatprep.subr.mxu0 0.0
    %281 = vmatpush1.msra.mxu0 0.0
    %282 = vmatprep.subr.mxu0 0.0
    %283 = vmatpush1.msra.mxu0 0.0
    %284 = vmatprep.mubr.f32.mxu0 0.0
    %285 = vmatmul.mubr.f32.gmra.mrb[0].mxu0 %v214
    %v286 = vpop.f32.mrb[0].mxu0
    %v287 = vadd.f32 0.0, %v286
    %v288 = vpop.f32.mrb[0].mxu0
    %289 = vdwg.mxu0
    %v290 = vxor.u32 %v287, 2147483648
    %v291 = vmul.f32 %v290, 1.442695
    %v292 = vpow.pop %v291
    %v293 = vadd.f32 %v292, 1.0
    %v294 = vrcp.pop %v293
    %v295 = vmul.f32 1.0, %v294
    %v296 = vld [vmem:[#allocation2] sm:$0xff]
    %v297 = vld [vmem:[#allocation2 + $0x10] sm:$0xff]
    %v298 = vld [vmem:[#allocation2 + $0x20] sm:$0xff]
    %v299 = vld [vmem:[#allocation2 + $0x30] sm:$0xff]
    %v300 = vld [vmem:[#allocation2 + $0x40] sm:$0xff]
    %v301 = vld [vmem:[#allocation2 + $0x50] sm:$0xff]
    %v302 = vld [vmem:[#allocation2 + $0x60] sm:$0xff]
    %v303 = vld [vmem:[#allocation2 + $0x70] sm:$0xff]
    %v304 = vlaneseq
    %v305 = vshrl.u32 %v304, 7
    %v306 = vsub.s32 0, %v305
    %v307 = vrot.slane %v295, %v306
    %309 = vbcast.lane.b32.xlu0 %v307, 256
    %v310 = vpop.permute.xlu0 %309
    %s312 = sor.u32 256, 8
    %313 = vbcast.lane.b32.xlu0 %v307, %s312
    %v314 = vpop.permute.xlu0 %313
    %s316 = sor.u32 256, 16
    %317 = vbcast.lane.b32.xlu0 %v307, %s316
    %v318 = vpop.permute.xlu0 %317
    %s320 = sor.u32 256, 24
    %321 = vbcast.lane.b32.xlu0 %v307, %s320
    %v322 = vpop.permute.xlu0 %321
    %v323 = vlaneseq
    %v324 = vshrl.u32 %v323, 7
    %v325 = vsub.s32 1, %v324
    %v326 = vrot.slane %v295, %v325
    %328 = vbcast.lane.b32.xlu0 %v326, 256
    %v329 = vpop.permute.xlu0 %328
    %s331 = sor.u32 256, 8
    %332 = vbcast.lane.b32.xlu0 %v326, %s331
    %v333 = vpop.permute.xlu0 %332
    %s335 = sor.u32 256, 16
    %336 = vbcast.lane.b32.xlu0 %v326, %s335
    %v337 = vpop.permute.xlu0 %336
    %s339 = sor.u32 256, 24
    %340 = vbcast.lane.b32.xlu0 %v326, %s339
    %v341 = vpop.permute.xlu0 %340
    %v342 = vmul.f32 %v296, %v310
    %v343 = vmul.f32 %v37, %v310
    %v344 = vmul.f32 %v297, %v314
    %v345 = vmul.f32 %v38, %v314
    %v346 = vmul.f32 %v298, %v318
    %v347 = vmul.f32 %v39, %v318
    %v348 = vmul.f32 %v299, %v322
    %v349 = vmul.f32 %v40, %v322
    %v350 = vmul.f32 %v300, %v329
    %v351 = vmul.f32 %v41, %v329
    %v352 = vmul.f32 %v301, %v333
    %v353 = vmul.f32 %v42, %v333
    %v354 = vmul.f32 %v302, %v337
    %v355 = vmul.f32 %v43, %v337
    %v356 = vmul.f32 %v303, %v341
    %v357 = vmul.f32 %v44, %v341
    %358 = vst [vmem:[#allocation5] sm:$0xff] %v342
    %359 = vst [vmem:[#allocation5 + $0x8] sm:$0xff] %v343
    %360 = vst [vmem:[#allocation5 + $0x10] sm:$0xff] %v344
    %361 = vst [vmem:[#allocation5 + $0x18] sm:$0xff] %v345
    %362 = vst [vmem:[#allocation5 + $0x20] sm:$0xff] %v346
    %363 = vst [vmem:[#allocation5 + $0x28] sm:$0xff] %v347
    %364 = vst [vmem:[#allocation5 + $0x30] sm:$0xff] %v348
    %365 = vst [vmem:[#allocation5 + $0x38] sm:$0xff] %v349
    %366 = vst [vmem:[#allocation5 + $0x40] sm:$0xff] %v350
    %367 = vst [vmem:[#allocation5 + $0x48] sm:$0xff] %v351
    %368 = vst [vmem:[#allocation5 + $0x50] sm:$0xff] %v352
    %369 = vst [vmem:[#allocation5 + $0x58] sm:$0xff] %v353
    %370 = vst [vmem:[#allocation5 + $0x60] sm:$0xff] %v354
    %371 = vst [vmem:[#allocation5 + $0x68] sm:$0xff] %v355
    %372 = vst [vmem:[#allocation5 + $0x70] sm:$0xff] %v356
    %373 = vst [vmem:[#allocation5 + $0x78] sm:$0xff] %v357
    // Predicated region
    $region18: #{tpu_custom_call.1} parent=1 // pred_check
      _
    $region19: #{tpu_custom_call.1} parent=1 // pred_check_branch
      %375 = sbr.rel (0) target = $region21
    $region20: #{tpu_custom_call.1} parent=1 // pred_region
      %s377 = ssub.s32 2048, 2048
      %378 = vsyncadd [#allocation4], %s377
      %s379 = sshll.u32 [#allocation5], 4
      %s380 = int_to_ptr.vmem [resolvable:$true] %s379
      %385 = dma.vmem_to_hbm [thread:$0]  %s380, 2048, %s3, [#allocation4], 256, 256, 16
    $region21: #{tpu_custom_call.1} parent=1 // pred_fallthru
      _
    // Predicated region
    $region22: #{tpu_custom_call.1} parent=1 // pred_check
      _
    $region23: #{tpu_custom_call.1} parent=1 // pred_check_branch
      %387 = sbr.rel (0) target = $region25
    $region24: #{tpu_custom_call.1} parent=1 // pred_region
      %388 = dma.done [#allocation4], 2048
    $region25: #{tpu_custom_call.1} parent=1 // pred_fallthru
      _
    %389 = vsyncpa [#allocation3], 1
    %390 = vsyncpa [#allocation4], 1

</llo_original>
